<compile_context>
chip_gen: v5e
topology: v5e:2x2
jax: 0.10.0
libtpu: 0.0.40
codegen_flags: <defaults>
</compile_context>

<pallas_src>
import functools

import jax
import jax.numpy as jnp
from jax.experimental import pallas as pl
from jax.experimental.pallas import tpu as pltpu

LANES = 128
SUBLANES = 8


def _loss_kernel(o_ref, t_ref, out_ref, acc_ref, *, rows, tile_rows, need_mask):
    i = pl.program_id(0)

    @pl.when(i == 0)
    def _():
        acc_ref[...] = jnp.zeros_like(acc_ref)

    d = t_ref[...].astype(jnp.float32) - o_ref[...].astype(jnp.float32)

    if need_mask:
        # Last tile may extend past `rows`; out-of-bounds data is undefined, mask it.
        row_ids = i * tile_rows + jax.lax.broadcasted_iota(jnp.int32, d.shape, 0)
        d = jnp.where(row_ids < rows, d, 0.0)

    dd = d * d
    # Fold the (tile_rows, 128) tile onto the resident (8, 128) accumulator with
    # pure vreg-wise adds (no per-step XLU reduction, no per-step scalar RMW).
    acc_ref[...] += dd.reshape(tile_rows // SUBLANES, SUBLANES, LANES).sum(axis=0)

    @pl.when(i == pl.num_programs(0) - 1)
    def _():
        # Single cross-sublane/lane reduction + scalar store, once per call.
        out_ref[0, 0] = jnp.sum(acc_ref[...])


def loss(output: jax.Array, target: jax.Array, *, tile_rows: int = 2048) -> jax.Array:
    """Squared Frobenius norm of (target - output), returned as an f32 scalar."""
    assert output.shape == target.shape, "output/target shapes must match"
    assert tile_rows > 0 and tile_rows % SUBLANES == 0

    o = output.reshape(-1)
    t = target.reshape(-1)
    n = o.shape[0]

    chunk = SUBLANES * LANES  # 1024-element aligned main region
    n_main = (n // chunk) * chunk

    # Unaligned tail (< 1024 elements): tiny plain-JAX reduction, avoids any
    # HBM-materializing padding concat of the full inputs.
    tail_sum = jnp.float32(0.0)
    if n_main < n:
        dt = t[n_main:].astype(jnp.float32) - o[n_main:].astype(jnp.float32)
        tail_sum = jnp.sum(dt * dt)

    if n_main == 0:
        return tail_sum

    o_main = o if n_main == n else o[:n_main]
    t_main = t if n_main == n else t[:n_main]

    rows = n_main // LANES                    # multiple of 8 by construction
    tr = min(tile_rows, rows)                 # multiple of 8 (both operands are)
    grid = (pl.cdiv(rows, tr),)
    need_mask = (rows % tr) != 0              # only the final tile can be partial

    o2 = o_main.reshape(rows, LANES)
    t2 = t_main.reshape(rows, LANES)

    kernel = functools.partial(
        _loss_kernel, rows=rows, tile_rows=tr, need_mask=need_mask
    )

    out = pl.pallas_call(
        kernel,
        out_shape=jax.ShapeDtypeStruct((1, 1), jnp.float32),
        grid_spec=pltpu.PrefetchScalarGridSpec(
            num_scalar_prefetch=0,
            grid=grid,
            in_specs=[
                pl.BlockSpec((tr, LANES), lambda i: (i, 0)),
                pl.BlockSpec((tr, LANES), lambda i: (i, 0)),
            ],
            out_specs=pl.BlockSpec(
                (1, 1), lambda i: (0, 0), memory_space=pltpu.SMEM
            ),
            scratch_shapes=[pltpu.VMEM((SUBLANES, LANES), jnp.float32)],
        ),
        compiler_params=pltpu.CompilerParams(
            dimension_semantics=("arbitrary",),
        ),
    )(o2, t2)

    return out[0, 0] + tail_sum


if __name__ == "__main__":
    key = jax.random.PRNGKey(0)

    def _check(shape, dtype=jnp.float32, **kw):
        k1, k2 = jax.random.split(jax.random.fold_in(key, hash(shape) % (2**31)))
        out = jax.random.normal(k1, shape, dtype=dtype)
        tgt = jax.random.normal(k2, shape, dtype=dtype)
        res = jax.block_until_ready(loss(out, tgt, **kw))
        ref = jnp.sum((tgt.astype(jnp.float32) - out.astype(jnp.float32)) ** 2)
        assert jnp.allclose(res, ref, rtol=1e-5, atol=1e-5), (shape, res, ref)

    # Auto-encoder reconstruction loss at a small NCHW shape (aligned case).
    _check((2, 4, 16, 16))
    # Unaligned total (tail handled in the wrapper).
    _check((3, 5, 7, 11))
    # Partial last tile exercised in-kernel (rows=24, tile_rows=16 -> masked block).
    _check((2, 3, 16, 32), tile_rows=16)

    print("KERNEL_OK")
</pallas_src>

<mosaic_0001>
module attributes {stable_mosaic.version = 11 : i64} {
  func.func @_loss_kernel(%arg0: i32, %arg1: memref<16x128xf32, #tpu.memory_space<vmem>>, %arg2: memref<16x128xf32, #tpu.memory_space<vmem>>, %arg3: memref<1x1xf32, #tpu.memory_space<smem>>, %arg4: memref<8x128xf32, #tpu.memory_space<vmem>>) attributes {dimension_semantics = [#tpu.dimension_semantics<arbitrary>], iteration_bounds = array<i64: 1>, scalar_prefetch = 0 : i64, scratch_operands = 1 : i64, tpu.core_type = #tpu.core_type<tc>, window_params = [{transform_indices = @transform_0, window_bounds = array<i64: 16, 128>}, {transform_indices = @transform_1, window_bounds = array<i64: 16, 128>}, {transform_indices = @transform_2, window_bounds = array<i64: 1, 1>}]} {
    %c0_i32 = arith.constant 0 : i32
    %0 = arith.cmpi eq, %arg0, %c0_i32 : i32
    %1 = arith.extui %0 : i1 to i32
    %c0_i32_0 = arith.constant 0 : i32
    %2 = arith.cmpi ne, %1, %c0_i32_0 : i32
    scf.if %2 {
      %cst_10 = arith.constant 0.000000e+00 : f32
      %15 = vector.broadcast %cst_10 : f32 to vector<8x128xf32>
      %c0_11 = arith.constant 0 : index
      %c0_12 = arith.constant 0 : index
      %16 = vector.load %arg4[%c0_11, %c0_12] : memref<8x128xf32, #tpu.memory_space<vmem>>, vector<8x128xf32>
      tpu.vector_store %arg4[%c0_11, %c0_12], %15 {strides = array<i32>} : memref<8x128xf32, #tpu.memory_space<vmem>>, vector<8x128xf32>,
    } else {
    }
    %c0 = arith.constant 0 : index
    %c0_1 = arith.constant 0 : index
    %3 = vector.load %arg2[%c0, %c0_1] : memref<16x128xf32, #tpu.memory_space<vmem>>, vector<16x128xf32>
    %c0_2 = arith.constant 0 : index
    %c0_3 = arith.constant 0 : index
    %4 = vector.load %arg1[%c0_2, %c0_3] : memref<16x128xf32, #tpu.memory_space<vmem>>, vector<16x128xf32>
    %5 = arith.subf %3, %4 : vector<16x128xf32>
    %6 = arith.mulf %5, %5 : vector<16x128xf32>
    %c0_4 = arith.constant 0 : index
    %c0_5 = arith.constant 0 : index
    %7 = vector.load %arg4[%c0_4, %c0_5] : memref<8x128xf32, #tpu.memory_space<vmem>>, vector<8x128xf32>
    %8 = vector.shape_cast %6 : vector<16x128xf32> to vector<2x8x128xf32>
    %cst = arith.constant dense<0.000000e+00> : vector<8x128xf32>
    %9 = vector.multi_reduction <add>, %8, %cst [0] : vector<2x8x128xf32> to vector<8x128xf32>
    %10 = arith.addf %7, %9 : vector<8x128xf32>
    %c0_6 = arith.constant 0 : index
    %c0_7 = arith.constant 0 : index
    %11 = vector.load %arg4[%c0_6, %c0_7] : memref<8x128xf32, #tpu.memory_space<vmem>>, vector<8x128xf32>
    tpu.vector_store %arg4[%c0_6, %c0_7], %10 {strides = array<i32>} : memref<8x128xf32, #tpu.memory_space<vmem>>, vector<8x128xf32>,
    %c0_i32_8 = arith.constant 0 : i32
    %12 = arith.cmpi eq, %arg0, %c0_i32_8 : i32
    %13 = arith.extui %12 : i1 to i32
    %c0_i32_9 = arith.constant 0 : i32
    %14 = arith.cmpi ne, %13, %c0_i32_9 : i32
    scf.if %14 {
      %c0_10 = arith.constant 0 : index
      %c0_11 = arith.constant 0 : index
      %15 = vector.load %arg4[%c0_10, %c0_11] : memref<8x128xf32, #tpu.memory_space<vmem>>, vector<8x128xf32>
      %16 = vector.shape_cast %15 : vector<8x128xf32> to vector<1x8x128xf32>
      %cst_12 = arith.constant dense<0.000000e+00> : vector<1xf32>
      %17 = vector.multi_reduction <add>, %16, %cst_12 [1, 2] : vector<1x8x128xf32> to vector<1xf32>
      %18 = vector.shape_cast %17 : vector<1xf32> to vector<1x1x1xf32>
      %19 = vector.extract %18[0, 0, 0] : f32 from vector<1x1x1xf32>
      %c0_13 = arith.constant 0 : index
      %c0_14 = arith.constant 0 : index
      %20 = memref.load %arg3[%c0_13, %c0_14] : memref<1x1xf32, #tpu.memory_space<smem>>
      memref.store %19, %arg3[%c0_13, %c0_14] : memref<1x1xf32, #tpu.memory_space<smem>>
    } else {
    }
    return
  }
  func.func @transform_0(%arg0: i32) -> (i32, i32) {
    %c0_i32 = arith.constant 0 : i32
    %c0_i32_0 = arith.constant 0 : i32
    return %arg0, %c0_i32 : i32, i32
  }
  func.func @transform_1(%arg0: i32) -> (i32, i32) {
    %c0_i32 = arith.constant 0 : i32
    %c0_i32_0 = arith.constant 0 : i32
    return %arg0, %c0_i32 : i32, i32
  }
  func.func @transform_2(%arg0: i32) -> (i32, i32) {
    %c0_i32 = arith.constant 0 : i32
    %c0_i32_0 = arith.constant 0 : i32
    %c0_i32_1 = arith.constant 0 : i32
    return %c0_i32, %c0_i32_0 : i32, i32
  }
}

</mosaic_0001>

<llo_original>
// kernel: tpu_custom_call.1
$region0: #{tpu_custom_call.1}
  #allocation0 [shape = 'u32[]', space=smem, size = 0x4, offset = 0x4, fixed_abs, tag = 'smem constant byte address 0x4 - core index']
  #allocation1 [shape = 'u32[72,128]{1,0:T(1,128)}', space=vmem, size = 0x9000, scoped, tag = 'internal scratch']
  #allocation2 [shape = 'f32[8,128]{1,0:T(8,128)}', space=vmem, size = 0x1000, scoped, tag = 'scratch operand']
  %s0 = inlined_call_operand.hbm [shape: f32[16,128], index: 0, kind: input, shape index: {}]
  %s1 = inlined_call_operand.hbm [shape: f32[16,128], index: 1, kind: input, shape index: {}]
  %s2 = inlined_call_operand.hbm [shape: f32[1,1], index: 2, kind: output, shape index: {}]
  %s3 = sld [smem:[#allocation0]]
  $region34: #{tpu_custom_call.1} parent=0
    _
  %s5 = ssub.s32 1, %s3
  %s6 = scalar_select 0, %s5, %s3
  $region1: #{tpu_custom_call.1} parent=0
    #allocation3 [shape = 'u8[8192]{0}', space=vmem, size = 0x2000, scoped, tag = 'input window, operand 0, single buffered']
    #allocation4 [shape = 's32[1]{0}', space=sflag, size = 0x4, scoped, tag = 'scoped memory for tpu_custom_call.1']
    #allocation5 [shape = 's32[1]{0}', space=sflag, size = 0x4, scoped, tag = 'scoped memory for tpu_custom_call.1']
    #allocation6 [shape = 'u8[8192]{0}', space=vmem, size = 0x2000, scoped, tag = 'input window, operand 1, single buffered']
    #allocation7 [shape = 's32[1]{0}', space=sflag, size = 0x4, scoped, tag = 'scoped memory for tpu_custom_call.1']
    #allocation8 [shape = 'u8[512]{0}', space=smem, size = 0x200, scoped, tag = 'output window, operand 0, single buffered']
    %7 = vsyncpa [#allocation4], 0
    %8 = vsyncpa [#allocation7], 0
    %9 = vsyncpa [#allocation5], 0
    // Predicated region
    $region2: #{tpu_custom_call.1} parent=1 // pred_check
      _
    $region3: #{tpu_custom_call.1} parent=1 // pred_check_branch
      %11 = sbr.rel (0) target = $region5
    $region4: #{tpu_custom_call.1} parent=1 // pred_region
      %13 = vsyncadd [#allocation4], 0
      %s14 = sshll.u32 %s0, 4
      %s15 = int_to_ptr.hbm [resolvable:$true] %s14
      %s16 = sshll.u32 [#allocation3], 4
      %s17 = int_to_ptr.vmem [resolvable:$true] %s16
      %22 = dma.hbm_to_vmem [thread:$0]  %s15, 256, %s17, [#allocation4], 128, 128, 8
    $region5: #{tpu_custom_call.1} parent=1 // pred_fallthru
      _
    // Predicated region
    $region6: #{tpu_custom_call.1} parent=1 // pred_check
      _
    $region7: #{tpu_custom_call.1} parent=1 // pred_check_branch
      %24 = sbr.rel (0) target = $region9
    $region8: #{tpu_custom_call.1} parent=1 // pred_region
      %26 = vsyncadd [#allocation7], 0
      %s27 = sshll.u32 %s1, 4
      %s28 = int_to_ptr.hbm [resolvable:$true] %s27
      %s29 = sshll.u32 [#allocation6], 4
      %s30 = int_to_ptr.vmem [resolvable:$true] %s29
      %35 = dma.hbm_to_vmem [thread:$0]  %s28, 256, %s30, [#allocation7], 128, 128, 8
    $region9: #{tpu_custom_call.1} parent=1 // pred_fallthru
      _
    // Predicated region
    $region10: #{tpu_custom_call.1} parent=1 // pred_check
      _
    $region11: #{tpu_custom_call.1} parent=1 // pred_check_branch
      %37 = sbr.rel (0) target = $region13
    $region12: #{tpu_custom_call.1} parent=1 // pred_region
      %39 = dma.done [#allocation4], 256
    $region13: #{tpu_custom_call.1} parent=1 // pred_fallthru
      _
    // Predicated region
    $region14: #{tpu_custom_call.1} parent=1 // pred_check
      _
    $region15: #{tpu_custom_call.1} parent=1 // pred_check_branch
      %41 = sbr.rel (0) target = $region17
    $region16: #{tpu_custom_call.1} parent=1 // pred_region
      %43 = dma.done [#allocation7], 256
    $region17: #{tpu_custom_call.1} parent=1 // pred_fallthru
      _
    %p44 = scmp.eq.s32.totalorder 0, 0
    // Predicated region
    $region18: #{tpu_custom_call.1} parent=1 // pred_check
      %p45 = pneg %p44
    $region19: #{tpu_custom_call.1} parent=1 // pred_check_branch
      %47 = sbr.rel (%p45) target = $region21
    $region20: #{tpu_custom_call.1} parent=1 // pred_region
      %48 = vst [vmem:[#allocation2] sm:$0xff] 0.0
    $region21: #{tpu_custom_call.1} parent=1 // pred_fallthru
      _
    %v49 = vld [vmem:[#allocation6] sm:$0xff]
    %v50 = vld [vmem:[#allocation6 + $0x8] sm:$0xff]
    %v51 = vld [vmem:[#allocation3] sm:$0xff]
    %v52 = vld [vmem:[#allocation3 + $0x8] sm:$0xff]
    %v53 = vsub.f32 %v49, %v51
    %v54 = vsub.f32 %v50, %v52
    %v55 = vmul.f32 %v53, %v53
    %v56 = vmul.f32 %v54, %v54
    %v57 = vld [vmem:[#allocation2] sm:$0xff]
    %v58 = vadd.f32 %v55, %v56
    %v59 = vadd.f32 %v57, %v58
    %60 = vst [vmem:[#allocation2] sm:$0xff] %v59
    // Predicated region
    $region22: #{tpu_custom_call.1} parent=1 // pred_check
      %p61 = pneg %p44
    $region23: #{tpu_custom_call.1} parent=1 // pred_check_branch
      %63 = sbr.rel (%p61) target = $region25
    $region24: #{tpu_custom_call.1} parent=1 // pred_region
      %v64 = vld [vmem:[#allocation2] sm:$0xff]
      %65 = vadd.xlane.f32.xlu0 %v64
      %v66 = vpop.xlane.xlu0 %65
      %v67 = vrot.slane %v66, 4
      %v68 = vadd.f32 %v66, %v67
      %v69 = vrot.slane %v68, 2
      %v70 = vadd.f32 %v68, %v69
      %v71 = vrot.slane %v70, 1
      %v72 = vadd.f32 %v70, %v71
      %s73 = vtos %v72
      %s74 = scalar_lea.smem [#allocation8], 0
      %75 = sst [smem:[%s74]] %s73
    $region25: #{tpu_custom_call.1} parent=1 // pred_fallthru
      _
    // Predicated region
    $region26: #{tpu_custom_call.1} parent=1 // pred_check
      _
    $region27: #{tpu_custom_call.1} parent=1 // pred_check_branch
      %77 = sbr.rel (0) target = $region29
    $region28: #{tpu_custom_call.1} parent=1 // pred_region
      %79 = vsyncadd [#allocation5], 0
      %s81 = sshll.u32 %s2, 4
      %s82 = int_to_ptr.hbm [resolvable:$true] %s81
      %84 = dma.smem_to_hbm [#allocation8], 16, %s82, [#allocation5]
    $region29: #{tpu_custom_call.1} parent=1 // pred_fallthru
      _
    // Predicated region
    $region30: #{tpu_custom_call.1} parent=1 // pred_check
      _
    $region31: #{tpu_custom_call.1} parent=1 // pred_check_branch
      %86 = sbr.rel (0) target = $region33
    $region32: #{tpu_custom_call.1} parent=1 // pred_region
      %88 = dma.done [#allocation5], 16
    $region33: #{tpu_custom_call.1} parent=1 // pred_fallthru
      _
    %89 = sfence
    %90 = vsyncpa [#allocation4], 1
    %91 = vsyncpa [#allocation7], 1
    %92 = vsyncpa [#allocation5], 1

</llo_original>
